<compile_context>
chip_gen: v5e
topology: v5e:2x2
jax: 0.10.0
libtpu: 0.0.40
codegen_flags: <defaults>
</compile_context>

<pallas_src>
import functools

import numpy as np
import jax
import jax.numpy as jnp
from jax.experimental import pallas as pl
from jax.experimental.pallas import tpu as pltpu

# Deterministic stand-ins for the checkpoint hparams referenced by the module.
LOG_SCALE_MIN = -7.0          # hparams.log_scale_min
QUANTIZE_CHANNELS = 256       # hparams.quantize_channels

_LANES = 128


def _sigmoid(x):
    return 1.0 / (1.0 + jnp.exp(-x))


def _softplus(x):
    # Numerically stable softplus; identical formula in kernel and reference.
    return jnp.maximum(x, 0.0) + jnp.log(1.0 + jnp.exp(-jnp.abs(x)))


def _dmll_kernel(len_ref, yhat_ref, y_ref, out_ref, *, nr_mix, num_classes,
                 log_scale_min, t_tile):
    """One grid step: batch element b, time tile t.

    yhat_ref: (1, 3, K, tile)  [logits | means | log_scales] planes
    y_ref:    (1, 1, tile)
    out_ref:  (1, 1, 128)      lane 0 holds the masked partial loss sum.
    """
    b = pl.program_id(0)
    ti = pl.program_id(1)
    length = len_ref[b]                      # already clamped to T in wrapper
    start = ti * t_tile

    @pl.when(start < length)
    def _active():
        logit_probs = yhat_ref[0, 0].astype(jnp.float32)          # (K, tile)
        means = yhat_ref[0, 1].astype(jnp.float32)                # (K, tile)
        log_scales = jnp.maximum(yhat_ref[0, 2].astype(jnp.float32),
                                 jnp.float32(log_scale_min))      # clamp(min=.)
        y = y_ref[0].astype(jnp.float32)                          # (1, tile)

        # --- discretized mixture-of-logistics per-component log-probability ---
        half_bin = jnp.float32(1.0 / (num_classes - 1))
        centered = y - means                                      # (K, tile)
        inv_stdv = jnp.exp(-log_scales)
        plus_in = inv_stdv * (centered + half_bin)
        min_in = inv_stdv * (centered - half_bin)

        sp_plus = _softplus(plus_in)
        sp_min = _softplus(min_in)
        log_cdf_plus = plus_in - sp_plus            # log sigmoid(plus_in)
        log_one_minus_cdf_min = -sp_min             # log(1 - sigmoid(min_in))
        # sigmoid(plus_in) - sigmoid(min_in) via exp(log-sigmoid): no recips.
        cdf_delta = jnp.exp(log_cdf_plus) - jnp.exp(min_in - sp_min)

        mid_in = inv_stdv * centered
        log_pdf_mid = mid_in - log_scales - 2.0 * _softplus(mid_in)

        inner_inner = jnp.where(
            cdf_delta > 1e-5,
            jnp.log(jnp.maximum(cdf_delta, 1e-12)),
            log_pdf_mid - jnp.float32(np.log((num_classes - 1) / 2.0)))
        inner = jnp.where(y > 0.999, log_one_minus_cdf_min, inner_inner)
        log_probs = jnp.where(y < -0.999, log_cdf_plus, inner)   # (K, tile)

        # loss = -logsumexp_k(log_probs + log_softmax(logits))
        #      = -( LSE_k(log_probs + logits) - LSE_k(logits) )
        def lse_k(x):                                  # sublane (axis=0) reduce
            m = jnp.max(x, axis=0, keepdims=True)
            return m + jnp.log(jnp.sum(jnp.exp(x - m), axis=0, keepdims=True))

        losses = -(lse_k(log_probs + logit_probs) - lse_k(logit_probs))  # (1,T)

        # Sequence mask from the scalar-prefetched lengths (covers padded T).
        pos = jax.lax.broadcasted_iota(jnp.int32, losses.shape, 1) + start
        mask = (pos < length).astype(jnp.float32)

        partial = jnp.sum(losses * mask)               # scalar partial sum
        lane = jax.lax.broadcasted_iota(jnp.int32, (1, 1, _LANES), 2)
        out_ref[...] = jnp.where(lane == 0, partial, jnp.float32(0.0))

    @pl.when(start >= length)
    def _skip():
        out_ref[...] = jnp.zeros_like(out_ref)


def _pick_time_tile(T, t_tile):
    """Lane-aligned (multiple of 128) time tile.

    Prefer the largest multiple of 128 <= t_tile that divides T (no padding);
    otherwise return the capped tile and let the wrapper pad T up to a
    multiple of it.  Never returns a full-T block for huge T, keeping VMEM
    temporaries bounded on every TPU generation.
    """
    t_tile = max(_LANES, (t_tile // _LANES) * _LANES)
    cap = min(t_tile, ((T + _LANES - 1) // _LANES) * _LANES)
    c = cap
    while c >= _LANES:
        if T % c == 0:
            return c
        c -= _LANES
    return cap


def discretized_mix_logistic_loss(y_hat, target, lengths=None, max_len=None, *,
                                  t_tile=2048,
                                  num_classes=QUANTIZE_CHANNELS,
                                  log_scale_min=LOG_SCALE_MIN):
    """y_hat: (B, C, T) with C = 3*K; target: (B, T, 1); lengths: (B,) ints.

    Returns sum(losses * mask) / sum(mask), matching the PyTorch module.
    Inputs may be f32 or bf16 (compute is f32 inside the kernel).
    """
    if lengths is None:
        raise RuntimeError("Should provide either lengths or mask")
    # TODO(synk): explicit `mask=` tensor argument path (and max_len != T) not
    # wired up; only the `lengths` path of the module is implemented.

    B, C, T = y_hat.shape
    assert C % 3 == 0 and C >= 3, "expect C = 3 * num_mixtures"
    K = C // 3
    if max_len is None:
        max_len = T
    assert max_len == T, "max_len must equal the time dimension of the inputs"

    lengths = jnp.minimum(jnp.asarray(lengths, dtype=jnp.int32), T)

    tile = _pick_time_tile(T, t_tile)
    num_t = (T + tile - 1) // tile
    T_pad = num_t * tile

    # (B, C, T) -> (B, 3, K, T): contiguous regroup, free; channel-group slices
    # become whole sublane planes inside the kernel (no relayouts).
    yh = jnp.reshape(y_hat, (B, 3, K, T))
    # (B, T, 1) -> (B, 1, T): identical memory order, free.
    yt = jnp.reshape(target, (B, 1, T))

    if T_pad != T:
        # Padded positions are >= length, so the in-kernel mask zeroes them.
        yh = jnp.pad(yh, ((0, 0), (0, 0), (0, 0), (0, T_pad - T)))
        yt = jnp.pad(yt, ((0, 0), (0, 0), (0, T_pad - T)))

    kernel = functools.partial(_dmll_kernel, nr_mix=K, num_classes=num_classes,
                               log_scale_min=log_scale_min, t_tile=tile)

    partials = pl.pallas_call(
        kernel,
        out_shape=jax.ShapeDtypeStruct((B, 1, num_t * _LANES), jnp.float32),
        grid_spec=pltpu.PrefetchScalarGridSpec(
            num_scalar_prefetch=1,
            grid=(B, num_t),
            in_specs=[
                pl.BlockSpec((1, 3, K, tile), lambda b, t, lens: (b, 0, 0, t)),
                pl.BlockSpec((1, 1, tile), lambda b, t, lens: (b, 0, t)),
            ],
            out_specs=pl.BlockSpec((1, 1, _LANES), lambda b, t, lens: (b, 0, t)),
        ),
        compiler_params=pltpu.CompilerParams(
            dimension_semantics=("parallel", "parallel")),
    )(lengths, yh, yt)

    # Denominator == sum(mask). (Matches PyTorch: NaN if all lengths are 0.)
    denom = jnp.sum(lengths).astype(jnp.float32)
    return jnp.sum(partials) / denom


def _reference_loss(y_hat, target, lengths, num_classes=QUANTIZE_CHANNELS,
                    log_scale_min=LOG_SCALE_MIN):
    """Pure-JAX mirror of the PyTorch module (discretized_mix_logistic_loss
    with reduce=False, then masked mean)."""
    B, C, T = y_hat.shape
    K = C // 3
    yh = jnp.transpose(y_hat, (0, 2, 1)).astype(jnp.float32)          # (B, T, C)
    logit_probs = yh[:, :, :K]
    means = yh[:, :, K:2 * K]
    log_scales = jnp.maximum(yh[:, :, 2 * K:3 * K], log_scale_min)
    y = target.astype(jnp.float32)                                    # (B, T, 1)

    half_bin = 1.0 / (num_classes - 1)
    centered = y - means
    inv_stdv = jnp.exp(-log_scales)
    plus_in = inv_stdv * (centered + half_bin)
    min_in = inv_stdv * (centered - half_bin)
    cdf_delta = _sigmoid(plus_in) - _sigmoid(min_in)
    log_cdf_plus = plus_in - _softplus(plus_in)
    log_one_minus_cdf_min = -_softplus(min_in)
    mid_in = inv_stdv * centered
    log_pdf_mid = mid_in - log_scales - 2.0 * _softplus(mid_in)

    inner_inner = jnp.where(cdf_delta > 1e-5,
                            jnp.log(jnp.maximum(cdf_delta, 1e-12)),
                            log_pdf_mid - np.log((num_classes - 1) / 2.0))
    inner = jnp.where(y > 0.999, log_one_minus_cdf_min, inner_inner)
    log_probs = jnp.where(y < -0.999, log_cdf_plus, inner)
    log_probs = log_probs + jax.nn.log_softmax(logit_probs, axis=-1)
    losses = -jax.nn.logsumexp(log_probs, axis=-1, keepdims=True)     # (B, T, 1)

    mask = (jnp.arange(T)[None, :] < lengths[:, None]
            ).astype(jnp.float32)[..., None]
    return jnp.sum(losses * mask) / jnp.sum(mask)


if __name__ == "__main__":
    key = jax.random.PRNGKey(0)
    B, K, T = 2, 10, 2048
    C = 3 * K
    k1, k2 = jax.random.split(key)

    y_hat = jax.random.normal(k1, (B, C, T), dtype=jnp.float32)      # net output
    target = jax.random.uniform(k2, (B, T, 1), dtype=jnp.float32,
                                minval=-1.0, maxval=1.0)             # in [-1, 1]
    lengths = jnp.array([2048, 1300], dtype=jnp.int32)

    loss_fn = jax.jit(functools.partial(discretized_mix_logistic_loss,
                                        t_tile=512))
    loss = jax.block_until_ready(loss_fn(y_hat, target, lengths))
    ref = _reference_loss(y_hat, target, lengths)
    assert jnp.allclose(loss, ref, rtol=1e-4, atol=1e-4), (loss, ref)

    # Ragged-T path: tile does not divide T -> wrapper pads, in-kernel mask
    # zeroes the padding, fully-padded tiles are skipped by pl.when.
    T2 = 1000
    k3, k4 = jax.random.split(k2)
    y_hat2 = jax.random.normal(k3, (B, C, T2), dtype=jnp.float32)
    target2 = jax.random.uniform(k4, (B, T2, 1), dtype=jnp.float32,
                                 minval=-1.0, maxval=1.0)
    lengths2 = jnp.array([1000, 700], dtype=jnp.int32)
    loss2 = jax.block_until_ready(
        jax.jit(functools.partial(discretized_mix_logistic_loss, t_tile=512))(
            y_hat2, target2, lengths2))
    ref2 = _reference_loss(y_hat2, target2, lengths2)
    assert jnp.allclose(loss2, ref2, rtol=1e-4, atol=1e-4), (loss2, ref2)

    print("KERNEL_OK")
</pallas_src>

<mosaic_0001>
module attributes {stable_mosaic.version = 11 : i64} {
  func.func @_dmll_kernel(%arg0: i32, %arg1: i32, %arg2: memref<2xi32, #tpu.memory_space<smem>>, %arg3: memref<1x3x10x512xf32, #tpu.memory_space<vmem>>, %arg4: memref<1x1x512xf32, #tpu.memory_space<vmem>>, %arg5: memref<1x1x128xf32, #tpu.memory_space<vmem>>) attributes {dimension_semantics = [#tpu.dimension_semantics<parallel>, #tpu.dimension_semantics<parallel>], iteration_bounds = array<i64: 2, 4>, scalar_prefetch = 1 : i64, scratch_operands = 0 : i64, tpu.core_type = #tpu.core_type<tc>, window_params = [{transform_indices = @transform_0, window_bounds = array<i64: 1, 3, 10, 512>}, {transform_indices = @transform_1, window_bounds = array<i64: 1, 1, 512>}, {transform_indices = @transform_2, window_bounds = array<i64: 1, 1, 128>}]} {
    %0 = arith.index_cast %arg0 : i32 to index
    %1 = memref.load %arg2[%0] : memref<2xi32, #tpu.memory_space<smem>>
    %c512_i32 = arith.constant 512 : i32
    %2 = arith.muli %arg1, %c512_i32 : i32
    %3 = arith.cmpi slt, %2, %1 : i32
    %4 = arith.extui %3 : i1 to i32
    %c0_i32 = arith.constant 0 : i32
    %5 = arith.cmpi ne, %4, %c0_i32 : i32
    scf.if %5 {
      %c0 = arith.constant 0 : index
      %c0_1 = arith.constant 0 : index
      %c0_2 = arith.constant 0 : index
      %c0_3 = arith.constant 0 : index
      %9 = vector.load %arg3[%c0, %c0_1, %c0_2, %c0_3] : memref<1x3x10x512xf32, #tpu.memory_space<vmem>>, vector<1x1x10x512xf32>
      %10 = vector.shape_cast %9 : vector<1x1x10x512xf32> to vector<10x512xf32>
      %c0_4 = arith.constant 0 : index
      %c1 = arith.constant 1 : index
      %c0_5 = arith.constant 0 : index
      %c0_6 = arith.constant 0 : index
      %11 = vector.load %arg3[%c0_4, %c1, %c0_5, %c0_6] : memref<1x3x10x512xf32, #tpu.memory_space<vmem>>, vector<1x1x10x512xf32>
      %12 = vector.shape_cast %11 : vector<1x1x10x512xf32> to vector<10x512xf32>
      %c0_7 = arith.constant 0 : index
      %c2 = arith.constant 2 : index
      %c0_8 = arith.constant 0 : index
      %c0_9 = arith.constant 0 : index
      %13 = vector.load %arg3[%c0_7, %c2, %c0_8, %c0_9] : memref<1x3x10x512xf32, #tpu.memory_space<vmem>>, vector<1x1x10x512xf32>
      %14 = vector.shape_cast %13 : vector<1x1x10x512xf32> to vector<10x512xf32>
      %cst = arith.constant -7.000000e+00 : f32
      %15 = vector.broadcast %cst : f32 to vector<10x512xf32>
      %16 = arith.maximumf %14, %15 : vector<10x512xf32>
      %c0_10 = arith.constant 0 : index
      %c0_11 = arith.constant 0 : index
      %c0_12 = arith.constant 0 : index
      %17 = vector.load %arg4[%c0_10, %c0_11, %c0_12] : memref<1x1x512xf32, #tpu.memory_space<vmem>>, vector<1x1x512xf32>
      %18 = vector.shape_cast %17 : vector<1x1x512xf32> to vector<1x512xf32>
      %19 = vector.broadcast %18 : vector<1x512xf32> to vector<10x512xf32>
      %20 = arith.subf %19, %12 : vector<10x512xf32>
      %cst_13 = arith.constant 0.000000e+00 : f32
      %21 = vector.broadcast %cst_13 : f32 to vector<10x512xf32>
      %22 = arith.subf %21, %16 : vector<10x512xf32>
      %23 = math.exp %22 : vector<10x512xf32>
      %cst_14 = arith.constant 0.00392156886 : f32
      %24 = vector.broadcast %cst_14 : f32 to vector<10x512xf32>
      %25 = arith.addf %20, %24 : vector<10x512xf32>
      %26 = arith.mulf %23, %25 : vector<10x512xf32>
      %cst_15 = arith.constant 0.00392156886 : f32
      %27 = vector.broadcast %cst_15 : f32 to vector<10x512xf32>
      %28 = arith.subf %20, %27 : vector<10x512xf32>
      %29 = arith.mulf %23, %28 : vector<10x512xf32>
      %cst_16 = arith.constant 0.000000e+00 : f32
      %30 = vector.broadcast %cst_16 : f32 to vector<10x512xf32>
      %31 = arith.maximumf %26, %30 : vector<10x512xf32>
      %32 = math.absf %26 : vector<10x512xf32>
      %cst_17 = arith.constant 0.000000e+00 : f32
      %33 = vector.broadcast %cst_17 : f32 to vector<10x512xf32>
      %34 = arith.subf %33, %32 : vector<10x512xf32>
      %35 = math.exp %34 : vector<10x512xf32>
      %cst_18 = arith.constant 1.000000e+00 : f32
      %36 = vector.broadcast %cst_18 : f32 to vector<10x512xf32>
      %37 = arith.addf %36, %35 : vector<10x512xf32>
      %38 = math.log %37 : vector<10x512xf32>
      %39 = arith.addf %31, %38 : vector<10x512xf32>
      %cst_19 = arith.constant 0.000000e+00 : f32
      %40 = vector.broadcast %cst_19 : f32 to vector<10x512xf32>
      %41 = arith.maximumf %29, %40 : vector<10x512xf32>
      %42 = math.absf %29 : vector<10x512xf32>
      %cst_20 = arith.constant 0.000000e+00 : f32
      %43 = vector.broadcast %cst_20 : f32 to vector<10x512xf32>
      %44 = arith.subf %43, %42 : vector<10x512xf32>
      %45 = math.exp %44 : vector<10x512xf32>
      %cst_21 = arith.constant 1.000000e+00 : f32
      %46 = vector.broadcast %cst_21 : f32 to vector<10x512xf32>
      %47 = arith.addf %46, %45 : vector<10x512xf32>
      %48 = math.log %47 : vector<10x512xf32>
      %49 = arith.addf %41, %48 : vector<10x512xf32>
      %50 = arith.subf %26, %39 : vector<10x512xf32>
      %cst_22 = arith.constant 0.000000e+00 : f32
      %51 = vector.broadcast %cst_22 : f32 to vector<10x512xf32>
      %52 = arith.subf %51, %49 : vector<10x512xf32>
      %53 = math.exp %50 : vector<10x512xf32>
      %54 = arith.subf %29, %49 : vector<10x512xf32>
      %55 = math.exp %54 : vector<10x512xf32>
      %56 = arith.subf %53, %55 : vector<10x512xf32>
      %57 = arith.mulf %23, %20 : vector<10x512xf32>
      %58 = arith.subf %57, %16 : vector<10x512xf32>
      %cst_23 = arith.constant 0.000000e+00 : f32
      %59 = vector.broadcast %cst_23 : f32 to vector<10x512xf32>
      %60 = arith.maximumf %57, %59 : vector<10x512xf32>
      %61 = math.absf %57 : vector<10x512xf32>
      %cst_24 = arith.constant 0.000000e+00 : f32
      %62 = vector.broadcast %cst_24 : f32 to vector<10x512xf32>
      %63 = arith.subf %62, %61 : vector<10x512xf32>
      %64 = math.exp %63 : vector<10x512xf32>
      %cst_25 = arith.constant 1.000000e+00 : f32
      %65 = vector.broadcast %cst_25 : f32 to vector<10x512xf32>
      %66 = arith.addf %65, %64 : vector<10x512xf32>
      %67 = math.log %66 : vector<10x512xf32>
      %68 = arith.addf %60, %67 : vector<10x512xf32>
      %cst_26 = arith.constant 2.000000e+00 : f32
      %69 = vector.broadcast %cst_26 : f32 to vector<10x512xf32>
      %70 = arith.mulf %69, %68 : vector<10x512xf32>
      %71 = arith.subf %58, %70 : vector<10x512xf32>
      %cst_27 = arith.constant 9.99999974E-6 : f32
      %72 = vector.broadcast %cst_27 : f32 to vector<10x512xf32>
      %73 = arith.cmpf ogt, %56, %72 : vector<10x512xf32>
      %cst_28 = arith.constant 9.99999996E-13 : f32
      %74 = vector.broadcast %cst_28 : f32 to vector<10x512xf32>
      %75 = arith.maximumf %56, %74 : vector<10x512xf32>
      %76 = math.log %75 : vector<10x512xf32>
      %cst_29 = arith.constant 4.8481164 : f32
      %77 = vector.broadcast %cst_29 : f32 to vector<10x512xf32>
      %78 = arith.subf %71, %77 : vector<10x512xf32>
      %79 = arith.select %73, %76, %78 : vector<10x512xi1>, vector<10x512xf32>
      %cst_30 = arith.constant 9.990000e-01 : f32
      %80 = vector.broadcast %cst_30 : f32 to vector<1x512xf32>
      %81 = arith.cmpf ogt, %18, %80 : vector<1x512xf32>
      %82 = vector.shape_cast %81 : vector<1x512xi1> to vector<1x512xi1>
      %83 = vector.broadcast %82 : vector<1x512xi1> to vector<10x512xi1>
      %84 = arith.select %83, %52, %79 : vector<10x512xi1>, vector<10x512xf32>
      %cst_31 = arith.constant -9.990000e-01 : f32
      %85 = vector.broadcast %cst_31 : f32 to vector<1x512xf32>
      %86 = arith.cmpf olt, %18, %85 : vector<1x512xf32>
      %87 = vector.shape_cast %86 : vector<1x512xi1> to vector<1x512xi1>
      %88 = vector.broadcast %87 : vector<1x512xi1> to vector<10x512xi1>
      %89 = arith.select %88, %50, %84 : vector<10x512xi1>, vector<10x512xf32>
      %90 = arith.addf %89, %10 : vector<10x512xf32>
      %cst_32 = arith.constant dense<0xFF800000> : vector<512xf32>
      %91 = vector.multi_reduction <maximumf>, %90, %cst_32 [0] : vector<10x512xf32> to vector<512xf32>
      %92 = vector.shape_cast %91 : vector<512xf32> to vector<1x512xf32>
      %93 = vector.broadcast %92 : vector<1x512xf32> to vector<10x512xf32>
      %94 = arith.subf %90, %93 : vector<10x512xf32>
      %95 = math.exp %94 : vector<10x512xf32>
      %cst_33 = arith.constant dense<0.000000e+00> : vector<512xf32>
      %96 = vector.multi_reduction <add>, %95, %cst_33 [0] : vector<10x512xf32> to vector<512xf32>
      %97 = vector.shape_cast %96 : vector<512xf32> to vector<1x512xf32>
      %98 = math.log %97 : vector<1x512xf32>
      %99 = arith.addf %92, %98 : vector<1x512xf32>
      %cst_34 = arith.constant dense<0xFF800000> : vector<512xf32>
      %100 = vector.multi_reduction <maximumf>, %10, %cst_34 [0] : vector<10x512xf32> to vector<512xf32>
      %101 = vector.shape_cast %100 : vector<512xf32> to vector<1x512xf32>
      %102 = vector.broadcast %101 : vector<1x512xf32> to vector<10x512xf32>
      %103 = arith.subf %10, %102 : vector<10x512xf32>
      %104 = math.exp %103 : vector<10x512xf32>
      %cst_35 = arith.constant dense<0.000000e+00> : vector<512xf32>
      %105 = vector.multi_reduction <add>, %104, %cst_35 [0] : vector<10x512xf32> to vector<512xf32>
      %106 = vector.shape_cast %105 : vector<512xf32> to vector<1x512xf32>
      %107 = math.log %106 : vector<1x512xf32>
      %108 = arith.addf %101, %107 : vector<1x512xf32>
      %109 = arith.subf %99, %108 : vector<1x512xf32>
      %cst_36 = arith.constant 0.000000e+00 : f32
      %110 = vector.broadcast %cst_36 : f32 to vector<1x512xf32>
      %111 = arith.subf %110, %109 : vector<1x512xf32>
      %112 = tpu.iota {dimensions = array<i32: 1>} : vector<1x512xi32>
      %113 = vector.broadcast %2 : i32 to vector<1x512xi32>
      %114 = arith.addi %112, %113 : vector<1x512xi32>
      %115 = vector.broadcast %1 : i32 to vector<1x512xi32>
      %116 = arith.cmpi slt, %114, %115 : vector<1x512xi32>
      %117 = arith.extui %116 : vector<1x512xi1> to vector<1x512xi32>
      %118 = arith.sitofp %117 : vector<1x512xi32> to vector<1x512xf32>
      %119 = arith.mulf %111, %118 : vector<1x512xf32>
      %120 = vector.shape_cast %119 : vector<1x512xf32> to vector<1x1x512xf32>
      %cst_37 = arith.constant dense<0.000000e+00> : vector<1xf32>
      %121 = vector.multi_reduction <add>, %120, %cst_37 [1, 2] : vector<1x1x512xf32> to vector<1xf32>
      %122 = vector.shape_cast %121 : vector<1xf32> to vector<1x1x1xf32>
      %123 = vector.extract %122[0, 0, 0] : f32 from vector<1x1x1xf32>
      %124 = tpu.iota {dimensions = array<i32: 2>} : vector<1x1x128xi32>
      %c0_i32_38 = arith.constant 0 : i32
      %125 = vector.broadcast %c0_i32_38 : i32 to vector<1x1x128xi32>
      %126 = arith.cmpi eq, %124, %125 : vector<1x1x128xi32>
      %cst_39 = arith.constant 0.000000e+00 : f32
      %127 = vector.broadcast %123 : f32 to vector<1x1x128xf32>
      %128 = vector.broadcast %cst_39 : f32 to vector<1x1x128xf32>
      %129 = arith.select %126, %127, %128 : vector<1x1x128xi1>, vector<1x1x128xf32>
      %c0_40 = arith.constant 0 : index
      %c0_41 = arith.constant 0 : index
      %c0_42 = arith.constant 0 : index
      %130 = vector.load %arg5[%c0_40, %c0_41, %c0_42] : memref<1x1x128xf32, #tpu.memory_space<vmem>>, vector<1x1x128xf32>
      tpu.vector_store %arg5[%c0_40, %c0_41, %c0_42], %129 {strides = array<i32>} : memref<1x1x128xf32, #tpu.memory_space<vmem>>, vector<1x1x128xf32>,
    } else {
    }
    %6 = arith.cmpi sge, %2, %1 : i32
    %7 = arith.extui %6 : i1 to i32
    %c0_i32_0 = arith.constant 0 : i32
    %8 = arith.cmpi ne, %7, %c0_i32_0 : i32
    scf.if %8 {
      %cst = arith.constant 0.000000e+00 : f32
      %9 = vector.broadcast %cst : f32 to vector<1x1x128xf32>
      %c0 = arith.constant 0 : index
      %c0_1 = arith.constant 0 : index
      %c0_2 = arith.constant 0 : index
      %10 = vector.load %arg5[%c0, %c0_1, %c0_2] : memref<1x1x128xf32, #tpu.memory_space<vmem>>, vector<1x1x128xf32>
      tpu.vector_store %arg5[%c0, %c0_1, %c0_2], %9 {strides = array<i32>} : memref<1x1x128xf32, #tpu.memory_space<vmem>>, vector<1x1x128xf32>,
    } else {
    }
    return
  }
  func.func @transform_0(%arg0: i32, %arg1: i32, %arg2: memref<2xi32, #tpu.memory_space<smem>>) -> (i32, i32, i32, i32) {
    %c0_i32 = arith.constant 0 : i32
    %c0_i32_0 = arith.constant 0 : i32
    %c0_i32_1 = arith.constant 0 : i32
    return %arg0, %c0_i32, %c0_i32_0, %arg1 : i32, i32, i32, i32
  }
  func.func @transform_1(%arg0: i32, %arg1: i32, %arg2: memref<2xi32, #tpu.memory_space<smem>>) -> (i32, i32, i32) {
    %c0_i32 = arith.constant 0 : i32
    %c0_i32_0 = arith.constant 0 : i32
    return %arg0, %c0_i32, %arg1 : i32, i32, i32
  }
  func.func @transform_2(%arg0: i32, %arg1: i32, %arg2: memref<2xi32, #tpu.memory_space<smem>>) -> (i32, i32, i32) {
    %c0_i32 = arith.constant 0 : i32
    %c0_i32_0 = arith.constant 0 : i32
    return %arg0, %c0_i32, %arg1 : i32, i32, i32
  }
}

</mosaic_0001>

<llo_original>
// kernel: discretized_mix_logistic_loss.1
$region0: #{discretized_mix_logistic_loss.1}
  #allocation0 [shape = 'u32[]', space=smem, size = 0x4, offset = 0x4, fixed_abs, tag = 'smem constant byte address 0x4 - core index']
  #allocation1 [shape = 'u32[72,128]{1,0:T(1,128)}', space=vmem, size = 0x9000, scoped, tag = 'internal scratch']
  #allocation2 [shape = 's32[1]{0}', space=sflag, size = 0x4, scoped, tag = 'scoped memory for discretized_mix_logistic_loss.1']
  #allocation3 [shape = 'u8[512]{0}', space=smem, size = 0x200, scoped, tag = 'prefetched SMEM operand 0']
  %s0 = inlined_call_operand.vmem [shape: s32[2], index: 0, kind: input, shape index: {}]
  %s1 = inlined_call_operand.vmem [shape: f32[2,3,10,2048], index: 1, kind: input, shape index: {}]
  %s2 = inlined_call_operand.vmem [shape: f32[2,1,2048], index: 2, kind: input, shape index: {}]
  %s3 = inlined_call_operand.vmem [shape: f32[2,1,512], index: 3, kind: output, shape index: {}]
  %s4 = sld [smem:[#allocation0]]
  $region72: #{discretized_mix_logistic_loss.1} parent=0
    _
  %s6 = ssub.s32 1, %s4
  %s7 = scalar_select 0, %s6, %s4
  %s9 = sshll.u32 %s0, 4
  %s10 = int_to_ptr.vmem [resolvable:$true] %s9
  %12 = dma.vmem_to_smem %s10, 16, [#allocation3], [#allocation2]
  %14 = dma.done [#allocation2], 16
  %15 = sfence
  $region1: #{discretized_mix_logistic_loss.1} parent=0
    #allocation4 [shape = 'u8[196608]{0}', space=vmem, size = 0x30000, scoped, tag = 'input window, operand 1']
    loop: start=0, step=1, limit=10
    $region2: #{discretized_mix_logistic_loss.1} parent=1 // loop_pre_header
      _
    $region3: #{discretized_mix_logistic_loss.1} parent=1 // loop_header
      %s17 = sphi 0, %s21
      %p18 = scmp.ge.s32.totalorder %s17, 10
      %s24 = sphi 0, %s36
      %s25 = sphi 0, %s32
      %s26 = sphi 0, %s24
      %s27 = sphi 0, %s25
      %s28 = sphi 0, %s26
      %s29 = sphi 0, %s27
      %s41 = sphi 0, %s43
      %s44 = sphi 0, %s41
      %s45 = sphi 0, %s44
      %s61 = sphi 0, %s45
      %s69 = sphi 0, %s71
      %s72 = sphi 0, %s69
      %s73 = sphi 0, %s72
      %s89 = sphi 0, %s73
      %s97 = sphi 0, %s99
      %s100 = sphi 0, %s97
      %s101 = sphi 0, %s100
      %s117 = sphi 0, %s101
    $region4: #{discretized_mix_logistic_loss.1} parent=1 // loop_header_branch
      %20 = sbr.rel (%p18) target = $region8
    $region5: #{discretized_mix_logistic_loss.1} parent=1 // loop_body
      %s22 = ssub.s32 %s17, 1
      %s23 = ssub.s32 %s17, 2
      %s30 = sadd.s32 1, %s25
      %p31 = scmp.ge.s32.totalorder %s30, 4
      %s32 = scalar_select %p31, 0, %s30
      %s33 = sadd.s32 1, %s24
      %s34 = scalar_select %p31, %s33, %s24
      %p35 = scmp.ge.s32.totalorder %s34, 2
      %s36 = scalar_select %p35, 0, %s34
      %s37 = ssub.s32 %s24, %s36
      %s38 = ssub.s32 %s25, %s32
      %s39 = sor.u32 %s37, %s38
      %p40 = scmp.eq.s32.totalorder %s39, 0
      %s42 = sadd.s32 %s41, 1
      %s43 = scalar_select %p40, %s41, %s42
      %p46 = pneg %p40
      %p47 = scmp.eq.s32.totalorder %s17, 7
      %p48 = por %p46, %p47
      %p49 = scmp.ne.s32.totalorder %s41, %s44
      %p50 = scmp.eq.s32.totalorder %s17, 0
      %p51 = por %p49, %p50
      %p52 = scmp.ne.s32.totalorder %s41, %s44
      %p53 = scmp.eq.s32.totalorder %s22, 7
      %p54 = por %p52, %p53
      %p55 = scmp.ne.s32.totalorder %s44, %s45
      %p56 = scmp.eq.s32.totalorder %s22, 0
      %p57 = por %p55, %p56
      %p58 = scmp.ne.s32.totalorder %s44, %s45
      %p59 = scmp.eq.s32.totalorder %s23, 7
      %p60 = por %p58, %p59
      %p62 = scmp.ne.s32.totalorder %s45, %s61
      %p63 = scmp.eq.s32.totalorder %s23, 0
      %p64 = por %p62, %p63
      %s65 = ssub.s32 %s24, %s36
      %s66 = ssub.s32 %s25, %s32
      %s67 = sor.u32 %s65, %s66
      %p68 = scmp.eq.s32.totalorder %s67, 0
      %s70 = sadd.s32 %s69, 1
      %s71 = scalar_select %p68, %s69, %s70
      %p74 = pneg %p68
      %p75 = scmp.eq.s32.totalorder %s17, 7
      %p76 = por %p74, %p75
      %p77 = scmp.ne.s32.totalorder %s69, %s72
      %p78 = scmp.eq.s32.totalorder %s17, 0
      %p79 = por %p77, %p78
      %p80 = scmp.ne.s32.totalorder %s69, %s72
      %p81 = scmp.eq.s32.totalorder %s22, 7
      %p82 = por %p80, %p81
      %p83 = scmp.ne.s32.totalorder %s72, %s73
      %p84 = scmp.eq.s32.totalorder %s22, 0
      %p85 = por %p83, %p84
      %p86 = scmp.ne.s32.totalorder %s72, %s73
      %p87 = scmp.eq.s32.totalorder %s23, 7
      %p88 = por %p86, %p87
      %p90 = scmp.ne.s32.totalorder %s73, %s89
      %p91 = scmp.eq.s32.totalorder %s23, 0
      %p92 = por %p90, %p91
      %s93 = ssub.s32 %s24, %s36
      %s94 = ssub.s32 %s25, %s32
      %s95 = sor.u32 %s93, %s94
      %p96 = scmp.eq.s32.totalorder %s95, 0
      %s98 = sadd.s32 %s97, 1
      %s99 = scalar_select %p96, %s97, %s98
      %p102 = pneg %p96
      %p103 = scmp.eq.s32.totalorder %s17, 7
      %p104 = por %p102, %p103
      %p105 = scmp.ne.s32.totalorder %s97, %s100
      %p106 = scmp.eq.s32.totalorder %s17, 0
      %p107 = por %p105, %p106
      %p108 = scmp.ne.s32.totalorder %s97, %s100
      %p109 = scmp.eq.s32.totalorder %s22, 7
      %p110 = por %p108, %p109
      %p111 = scmp.ne.s32.totalorder %s100, %s101
      %p112 = scmp.eq.s32.totalorder %s22, 0
      %p113 = por %p111, %p112
      %p114 = scmp.ne.s32.totalorder %s100, %s101
      %p115 = scmp.eq.s32.totalorder %s23, 7
      %p116 = por %p114, %p115
      %p118 = scmp.ne.s32.totalorder %s101, %s117
      %p119 = scmp.eq.s32.totalorder %s23, 0
      %p120 = por %p118, %p119
      %p121 = scmp.le.s32.totalorder 1, %s17
      %p122 = scmp.lt.s32.totalorder %s17, 9
      %p123 = pnand %p121, %p122
      %p124 = pneg %p123
      // Predicated region
      $region9: #{discretized_mix_logistic_loss.1} parent=5 // pred_check
        _
      $region10: #{discretized_mix_logistic_loss.1} parent=5 // pred_check_branch
        %126 = sbr.rel (%p123) target = $region12
      $region11: #{discretized_mix_logistic_loss.1} parent=5 // pred_region
        %s127 = ssub.s32 %s17, 1
      $region12: #{discretized_mix_logistic_loss.1} parent=5 // pred_fallthru
        _
      %p128 = scmp.lt.s32.totalorder %s17, 8
      // Predicated region
      $region13: #{discretized_mix_logistic_loss.1} parent=5 // pred_check
        %p129 = pneg %p128
      $region14: #{discretized_mix_logistic_loss.1} parent=5 // pred_check_branch
        %131 = sbr.rel (%p129) target = $region16
      $region15: #{discretized_mix_logistic_loss.1} parent=5 // pred_region
        // Predicated region
        $region17: #{discretized_mix_logistic_loss.1} parent=15 // pred_check
          %p132 = pneg %p51
        $region18: #{discretized_mix_logistic_loss.1} parent=15 // pred_check_branch
          %134 = sbr.rel (%p132) target = $region20
        $region19: #{discretized_mix_logistic_loss.1} parent=15 // pred_region
          %s135 = sand.u32 %s41, 1
          %s136 = sand.u32 %s41, 1
          %s137 = smul.addr %s136, 192
          %s138 = scalar_lea.vmem [#allocation4], %s137
          %s139 = smul.u32 4, %s25
          %s140 = smul.addr %s24, 96
          %s141 = sadd.s32 %s139, %s140
          %s142 = smul.addr %s141, 8
          %s143 = scalar_lea.vmem %s1, %s142
          // Predicated region
          $region21: #{discretized_mix_logistic_loss.1} parent=19 // pred_check
            _
          $region22: #{discretized_mix_logistic_loss.1} parent=19 // pred_check_branch
            %145 = sbr.rel (0) target = $region24
          $region23: #{discretized_mix_logistic_loss.1} parent=19 // pred_region
            // Predicated region
            $region25: #{discretized_mix_logistic_loss.1} parent=23 // pred_check
              _
            $region26: #{discretized_mix_logistic_loss.1} parent=23 // pred_check_branch
              %147 = sbr.rel (0) target = $region28
            $region27: #{discretized_mix_logistic_loss.1} parent=23 // pred_region
              loop: start=0, step=1, limit=1
              $region29: #{discretized_mix_logistic_loss.1} parent=27 // loop_pre_header
                _
              $region30: #{discretized_mix_logistic_loss.1} parent=27 // loop_header
                %s149 = sphi 0, %s153
                %p150 = scmp.ge.s32.totalorder %s149, 1
                %s154 = sphi %s143, %s143
                %s155 = sphi %s138, %s138
              $region31: #{discretized_mix_logistic_loss.1} parent=27 // loop_header_branch
                %152 = sbr.rel (%p150) target = $region35
              $region32: #{discretized_mix_logistic_loss.1} parent=27 // loop_body
                %v156 = vld [vmem:[%s154] sm:$0xff]
                %157 = vst [vmem:[%s155] sm:$0xff] %v156
                %v158 = vld [vmem:[%s154 + $0x8] sm:$0xff]
                %159 = vst [vmem:[%s155 + $0x8] sm:$0xff] %v158
                %v160 = vld [vmem:[%s154 + $0x10] sm:$0xff]
                %161 = vst [vmem:[%s155 + $0x10] sm:$0xff] %v160
                %v162 = vld [vmem:[%s154 + $0x18] sm:$0xff]
                %163 = vst [vmem:[%s155 + $0x18] sm:$0xff] %v162
                %v164 = vld [vmem:[%s154 + $0x80] sm:$0xff]
                %165 = vst [vmem:[%s155 + $0x20] sm:$0xff] %v164
                %v166 = vld [vmem:[%s154 + $0x88] sm:$0xff]
                %167 = vst [vmem:[%s155 + $0x28] sm:$0xff] %v166
                %v168 = vld [vmem:[%s154 + $0x90] sm:$0xff]
                %169 = vst [vmem:[%s155 + $0x30] sm:$0xff] %v168
                %v170 = vld [vmem:[%s154 + $0x98] sm:$0xff]
                %171 = vst [vmem:[%s155 + $0x38] sm:$0xff] %v170
                %v172 = vld [vmem:[%s154 + $0x100] sm:$0xff]
                %173 = vst [vmem:[%s155 + $0x40] sm:$0xff] %v172
                %v174 = vld [vmem:[%s154 + $0x108] sm:$0xff]
                %175 = vst [vmem:[%s155 + $0x48] sm:$0xff] %v174
                %v176 = vld [vmem:[%s154 + $0x110] sm:$0xff]
                %177 = vst [vmem:[%s155 + $0x50] sm:$0xff] %v176
                %v178 = vld [vmem:[%s154 + $0x118] sm:$0xff]
                %179 = vst [vmem:[%s155 + $0x58] sm:$0xff] %v178
                %v180 = vld [vmem:[%s154 + $0x180] sm:$0xff]
                %181 = vst [vmem:[%s155 + $0x60] sm:$0xff] %v180
                %v182 = vld [vmem:[%s154 + $0x188] sm:$0xff]
                %183 = vst [vmem:[%s155 + $0x68] sm:$0xff] %v182
                %v184 = vld [vmem:[%s154 + $0x190] sm:$0xff]
                %185 = vst [vmem:[%s155 + $0x70] sm:$0xff] %v184
                %v186 = vld [vmem:[%s154 + $0x198] sm:$0xff]
                %187 = vst [vmem:[%s155 + $0x78] sm:$0xff] %v186
                %v188 = vld [vmem:[%s154 + $0x200] sm:$0xff]
                %189 = vst [vmem:[%s155 + $0x80] sm:$0xff] %v188
                %v190 = vld [vmem:[%s154 + $0x208] sm:$0xff]
                %191 = vst [vmem:[%s155 + $0x88] sm:$0xff] %v190
                %v192 = vld [vmem:[%s154 + $0x210] sm:$0xff]
                %193 = vst [vmem:[%s155 + $0x90] sm:$0xff] %v192
                %v194 = vld [vmem:[%s154 + $0x218] sm:$0xff]
                %195 = vst [vmem:[%s155 + $0x98] sm:$0xff] %v194
                %v196 = vld [vmem:[%s154 + $0x280] sm:$0xff]
                %197 = vst [vmem:[%s155 + $0xa0] sm:$0xff] %v196
                %v198 = vld [vmem:[%s154 + $0x288] sm:$0xff]
                %199 = vst [vmem:[%s155 + $0xa8] sm:$0xff] %v198
                %v200 = vld [vmem:[%s154 + $0x290] sm:$0xff]
                %201 = vst [vmem:[%s155 + $0xb0] sm:$0xff] %v200
                %v202 = vld [vmem:[%s154 + $0x298] sm:$0xff]
                %203 = vst [vmem:[%s155 + $0xb8] sm:$0xff] %v202
              $region33: #{discretized_mix_logistic_loss.1} parent=27 // loop_footer
                %s153 = sadd.s32 1, %s149
              $region34: #{discretized_mix_logistic_loss.1} parent=27 // loop_footer_branch
                %148 = sbr.rel target = $region30
              $region35: #{discretized_mix_logistic_loss.1} parent=27 // loop_exit
                _
            $region28: #{discretized_mix_logistic_loss.1} parent=23 // pred_fallthru
              _
            // Predicated region
            $region36: #{discretized_mix_logistic_loss.1} parent=23 // pred_check
              _
            $region37: #{discretized_mix_logistic_loss.1} parent=23 // pred_check_branch
              %205 = sbr.rel target = $region39
            $region38: #{discretized_mix_logistic_loss.1} parent=23 // pred_region
              _
            $region39: #{discretized_mix_logistic_loss.1} parent=23 // pred_fallthru
              _
          $region24: #{discretized_mix_logistic_loss.1} parent=19 // pred_fallthru
            _
          %206 = vnop
        $region20: #{discretized_mix_logistic_loss.1} parent=15 // pred_fallthru
          _
        // Predicated region
        $region40: #{discretized_mix_logistic_loss.1} parent=15 // pred_check
          %p207 = pneg %p79
        $region41: #{discretized_mix_logistic_loss.1} parent=15 // pred_check_branch
          %209 = sbr.rel (%p207) target = $region43
        $region42: #{discretized_mix_logistic_loss.1} parent=15 // pred_region
          %s210 = smul.u32 4, %s25
          %p211 = scmp.lt.s32.totalorder %s24, 1
          %s212 = scalar_select %p211, %s24, 1
          %p213 = scmp.lt.s32.totalorder %s210, 15
          %s214 = scalar_select %p213, %s210, 15
          %s215 = smul.addr %s212, 16
          %s216 = sadd.s32 %s214, %s215
          %s217 = scalar_lea.vmem %s2, %s216
          %s218 = smul.u32 4, %s25
        $region43: #{discretized_mix_logistic_loss.1} parent=15 // pred_fallthru
          _
      $region16: #{discretized_mix_logistic_loss.1} parent=5 // pred_fallthru
        _
      %p219 = scmp.le.s32.totalorder 1, %s17
      %p220 = scmp.lt.s32.totalorder %s17, 9
      %p221 = pnand %p219, %p220
      %p222 = pneg %p221
      // Predicated region
      $region44: #{discretized_mix_logistic_loss.1} parent=5 // pred_check
        _
      $region45: #{discretized_mix_logistic_loss.1} parent=5 // pred_check_branch
        %224 = sbr.rel (%p221) target = $region47
      $region46: #{discretized_mix_logistic_loss.1} parent=5 // pred_region
        %s225 = ssub.s32 %s17, 1
        %s226 = sand.u32 %s44, 1
        %s227 = sand.u32 %s44, 1
        %s228 = smul.addr %s227, 192
        %s229 = scalar_lea.vmem [#allocation4], %s228
        // Predicated region
        $region48: #{discretized_mix_logistic_loss.1} parent=46 // pred_check
          %p230 = pneg %p57
        $region49: #{discretized_mix_logistic_loss.1} parent=46 // pred_check_branch
          %232 = sbr.rel (%p230) target = $region51
        $region50: #{discretized_mix_logistic_loss.1} parent=46 // pred_region
          _
        $region51: #{discretized_mix_logistic_loss.1} parent=46 // pred_fallthru
          _
        %s233 = sand.u32 %s44, 1
        %s234 = sand.u32 %s44, 1
        %s235 = smul.addr %s234, 192
        %s236 = scalar_lea.vmem [#allocation4], %s235
        %p237 = pneg %p57
        %p238 = pneg %p54
        %s239 = smul.u32 4, %s27
        %p240 = scmp.lt.s32.totalorder %s26, 1
        %s241 = scalar_select %p240, %s26, 1
        %p242 = scmp.lt.s32.totalorder %s239, 15
        %s243 = scalar_select %p242, %s239, 15
        %s244 = smul.addr %s241, 16
        %s245 = sadd.s32 %s243, %s244
        %s246 = scalar_lea.vmem %s2, %s245
        %p247 = pneg %p85
        %p248 = pneg %p82
        %p249 = pneg %p113
        %p250 = pneg %p110
        %p251 = scmp.lt.s32.totalorder %s26, 1
        %s252 = scalar_select %p251, %s26, 1
        %p253 = scmp.lt.s32.totalorder %s27, 3
        %s254 = scalar_select %p253, %s27, 3
        %s255 = smul.addr %s252, 4
        %s256 = sadd.s32 %s254, %s255
        %s257 = scalar_lea.vmem %s3, %s256
        %s258 = smul.u32 4, %s27
        %s259 = smul.u32 4, %s27
        %p260 = scmp.lt.s32.totalorder %s26, 1
        %s261 = scalar_select %p260, %s26, 1
        %p262 = scmp.lt.s32.totalorder %s259, 15
        %s263 = scalar_select %p262, %s259, 15
        %s264 = smul.addr %s261, 16
        %s265 = sadd.s32 %s263, %s264
        %s266 = scalar_lea.vmem %s2, %s265
        %s267 = smul.u32 4, %s27
        %p268 = scmp.lt.s32.totalorder %s26, 1
        %s269 = scalar_select %p268, %s26, 1
        %p270 = scmp.lt.s32.totalorder %s27, 3
        %s271 = scalar_select %p270, %s27, 3
        %s272 = smul.addr %s269, 4
        %s273 = sadd.s32 %s271, %s272
        %s274 = scalar_lea.vmem %s3, %s273
        %s275 = sld [smem:[#allocation3 + %s26]]
        %s276 = smul.u32 %s27, 512
        %p277 = scmp.lt.s32.totalorder %s276, %s275
        // Predicated region
        $region52: #{discretized_mix_logistic_loss.1} parent=46 // pred_check
          %p278 = pneg %p277
        $region53: #{discretized_mix_logistic_loss.1} parent=46 // pred_check_branch
          %280 = sbr.rel (%p278) target = $region55
        $region54: #{discretized_mix_logistic_loss.1} parent=46 // pred_region
          %v281 = vld [vmem:[%s229] sm:$0xff]
          %v282 = vld [vmem:[%s229 + $0x8] sm:$0xff]
          %v283 = vld [vmem:[%s229 + $0x10] sm:$0xff]
          %v284 = vld [vmem:[%s229 + $0x18] sm:$0xff]
          %v285 = vld [vmem:[%s229 + $0x20] sm:$0x3]
          %v286 = vld [vmem:[%s229 + $0x28] sm:$0x3]
          %v287 = vld [vmem:[%s229 + $0x30] sm:$0x3]
          %v288 = vld [vmem:[%s229 + $0x38] sm:$0x3]
          %s289 = scalar_lea.vmem %s229, 64 [#allocation4]
          %v290 = vld [vmem:[%s289] sm:$0xff]
          %v291 = vld [vmem:[%s289 + $0x8] sm:$0xff]
          %v292 = vld [vmem:[%s289 + $0x10] sm:$0xff]
          %v293 = vld [vmem:[%s289 + $0x18] sm:$0xff]
          %v294 = vld [vmem:[%s289 + $0x20] sm:$0x3]
          %v295 = vld [vmem:[%s289 + $0x28] sm:$0x3]
          %v296 = vld [vmem:[%s289 + $0x30] sm:$0x3]
          %v297 = vld [vmem:[%s289 + $0x38] sm:$0x3]
          %s298 = scalar_lea.vmem %s229, 128 [#allocation4]
          %v299 = vld [vmem:[%s298] sm:$0xff]
          %v300 = vld [vmem:[%s298 + $0x8] sm:$0xff]
          %v301 = vld [vmem:[%s298 + $0x10] sm:$0xff]
          %v302 = vld [vmem:[%s298 + $0x18] sm:$0xff]
          %v303 = vld [vmem:[%s298 + $0x20] sm:$0x3]
          %v304 = vld [vmem:[%s298 + $0x28] sm:$0x3]
          %v305 = vld [vmem:[%s298 + $0x30] sm:$0x3]
          %v306 = vld [vmem:[%s298 + $0x38] sm:$0x3]
          %v307 = vmax.f32 %v299, -7.0
          %v308 = vmax.f32 %v300, -7.0
          %v309 = vmax.f32 %v301, -7.0
          %v310 = vmax.f32 %v302, -7.0
          %v311 = vmax.f32 %v303, -7.0
          %v312 = vmax.f32 %v304, -7.0
          %v313 = vmax.f32 %v305, -7.0
          %v314 = vmax.f32 %v306, -7.0
          %v315 = vld [vmem:[%s266] sm:$0xf]
          %v317 = vperm.slane %v315, 0
          %v318 = vperm.slane %v315, 1
          %v319 = vperm.slane %v315, 2
          %v320 = vperm.slane %v315, 3
          %v325 = vsub.f32 %v317, %v290
          %v326 = vsub.f32 %v318, %v291
          %v327 = vsub.f32 %v319, %v292
          %v328 = vsub.f32 %v320, %v293
          %v329 = vsub.f32 %v317, %v294
          %v330 = vsub.f32 %v318, %v295
          %v331 = vsub.f32 %v319, %v296
          %v332 = vsub.f32 %v320, %v297
          %v333 = vsub.f32 0.0, %v307
          %v334 = vsub.f32 0.0, %v308
          %v335 = vsub.f32 0.0, %v309
          %v336 = vsub.f32 0.0, %v310
          %v337 = vsub.f32 0.0, %v311
          %v338 = vsub.f32 0.0, %v312
          %v339 = vsub.f32 0.0, %v313
          %v340 = vsub.f32 0.0, %v314
          %v341 = vmul.f32 %v333, 1.442695
          %v342 = vpow.pop %v341
          %v343 = vmul.f32 %v334, 1.442695
          %v344 = vpow.pop %v343
          %v345 = vmul.f32 %v335, 1.442695
          %v346 = vpow.pop %v345
          %v347 = vmul.f32 %v336, 1.442695
          %v348 = vpow.pop %v347
          %v349 = vmul.f32 %v337, 1.442695
          %v350 = vpow.pop %v349
          %v351 = vmul.f32 %v338, 1.442695
          %v352 = vpow.pop %v351
          %v353 = vmul.f32 %v339, 1.442695
          %v354 = vpow.pop %v353
          %v355 = vmul.f32 %v340, 1.442695
          %v356 = vpow.pop %v355
          %v357 = vadd.f32 %v325, 0.003921569
          %v358 = vadd.f32 %v326, 0.003921569
          %v359 = vadd.f32 %v327, 0.003921569
          %v360 = vadd.f32 %v328, 0.003921569
          %v361 = vadd.f32 %v329, 0.003921569
          %v362 = vadd.f32 %v330, 0.003921569
          %v363 = vadd.f32 %v331, 0.003921569
          %v364 = vadd.f32 %v332, 0.003921569
          %v365 = vmul.f32 %v342, %v357
          %v366 = vmul.f32 %v344, %v358
          %v367 = vmul.f32 %v346, %v359
          %v368 = vmul.f32 %v348, %v360
          %v369 = vmul.f32 %v350, %v361
          %v370 = vmul.f32 %v352, %v362
          %v371 = vmul.f32 %v354, %v363
          %v372 = vmul.f32 %v356, %v364
          %v373 = vsub.f32 %v325, 0.003921569
          %v374 = vsub.f32 %v326, 0.003921569
          %v375 = vsub.f32 %v327, 0.003921569
          %v376 = vsub.f32 %v328, 0.003921569
          %v377 = vsub.f32 %v329, 0.003921569
          %v378 = vsub.f32 %v330, 0.003921569
          %v379 = vsub.f32 %v331, 0.003921569
          %v380 = vsub.f32 %v332, 0.003921569
          %v381 = vmul.f32 %v342, %v373
          %v382 = vmul.f32 %v344, %v374
          %v383 = vmul.f32 %v346, %v375
          %v384 = vmul.f32 %v348, %v376
          %v385 = vmul.f32 %v350, %v377
          %v386 = vmul.f32 %v352, %v378
          %v387 = vmul.f32 %v354, %v379
          %v388 = vmul.f32 %v356, %v380
          %v389 = vmax.f32 %v365, 0.0
          %v390 = vmax.f32 %v366, 0.0
          %v391 = vmax.f32 %v367, 0.0
          %v392 = vmax.f32 %v368, 0.0
          %v393 = vmax.f32 %v369, 0.0
          %v394 = vmax.f32 %v370, 0.0
          %v395 = vmax.f32 %v371, 0.0
          %v396 = vmax.f32 %v372, 0.0
          %v397 = vand.u32 2147483647, %v365
          %v398 = vand.u32 2147483647, %v366
          %v399 = vand.u32 2147483647, %v367
          %v400 = vand.u32 2147483647, %v368
          %v401 = vand.u32 2147483647, %v369
          %v402 = vand.u32 2147483647, %v370
          %v403 = vand.u32 2147483647, %v371
          %v404 = vand.u32 2147483647, %v372
          %v405 = vsub.f32 0.0, %v397
          %v406 = vsub.f32 0.0, %v398
          %v407 = vsub.f32 0.0, %v399
          %v408 = vsub.f32 0.0, %v400
          %v409 = vsub.f32 0.0, %v401
          %v410 = vsub.f32 0.0, %v402
          %v411 = vsub.f32 0.0, %v403
          %v412 = vsub.f32 0.0, %v404
          %v413 = vmul.f32 %v405, 1.442695
          %v414 = vpow.pop %v413
          %v415 = vmul.f32 %v406, 1.442695
          %v416 = vpow.pop %v415
          %v417 = vmul.f32 %v407, 1.442695
          %v418 = vpow.pop %v417
          %v419 = vmul.f32 %v408, 1.442695
          %v420 = vpow.pop %v419
          %v421 = vmul.f32 %v409, 1.442695
          %v422 = vpow.pop %v421
          %v423 = vmul.f32 %v410, 1.442695
          %v424 = vpow.pop %v423
          %v425 = vmul.f32 %v411, 1.442695
          %v426 = vpow.pop %v425
          %v427 = vmul.f32 %v412, 1.442695
          %v428 = vpow.pop %v427
          %v429 = vadd.f32 %v414, 1.0
          %v430 = vadd.f32 %v416, 1.0
          %v431 = vadd.f32 %v418, 1.0
          %v432 = vadd.f32 %v420, 1.0
          %v433 = vadd.f32 %v422, 1.0
          %v434 = vadd.f32 %v424, 1.0
          %v435 = vadd.f32 %v426, 1.0
          %v436 = vadd.f32 %v428, 1.0
          %v437 = vlog2.pop %v429
          %v438 = vmul.f32 %v437, 0.6931472
          %v439 = vlog2.pop %v430
          %v440 = vmul.f32 %v439, 0.6931472
          %v441 = vlog2.pop %v431
          %v442 = vmul.f32 %v441, 0.6931472
          %v443 = vlog2.pop %v432
          %v444 = vmul.f32 %v443, 0.6931472
          %v445 = vlog2.pop %v433
          %v446 = vmul.f32 %v445, 0.6931472
          %v447 = vlog2.pop %v434
          %v448 = vmul.f32 %v447, 0.6931472
          %v449 = vlog2.pop %v435
          %v450 = vmul.f32 %v449, 0.6931472
          %v451 = vlog2.pop %v436
          %v452 = vmul.f32 %v451, 0.6931472
          %v453 = vadd.f32 %v389, %v438
          %v454 = vadd.f32 %v390, %v440
          %v455 = vadd.f32 %v391, %v442
          %v456 = vadd.f32 %v392, %v444
          %v457 = vadd.f32 %v393, %v446
          %v458 = vadd.f32 %v394, %v448
          %v459 = vadd.f32 %v395, %v450
          %v460 = vadd.f32 %v396, %v452
          %v461 = vmax.f32 %v381, 0.0
          %v462 = vmax.f32 %v382, 0.0
          %v463 = vmax.f32 %v383, 0.0
          %v464 = vmax.f32 %v384, 0.0
          %v465 = vmax.f32 %v385, 0.0
          %v466 = vmax.f32 %v386, 0.0
          %v467 = vmax.f32 %v387, 0.0
          %v468 = vmax.f32 %v388, 0.0
          %v469 = vand.u32 2147483647, %v381
          %v470 = vand.u32 2147483647, %v382
          %v471 = vand.u32 2147483647, %v383
          %v472 = vand.u32 2147483647, %v384
          %v473 = vand.u32 2147483647, %v385
          %v474 = vand.u32 2147483647, %v386
          %v475 = vand.u32 2147483647, %v387
          %v476 = vand.u32 2147483647, %v388
          %v477 = vsub.f32 0.0, %v469
          %v478 = vsub.f32 0.0, %v470
          %v479 = vsub.f32 0.0, %v471
          %v480 = vsub.f32 0.0, %v472
          %v481 = vsub.f32 0.0, %v473
          %v482 = vsub.f32 0.0, %v474
          %v483 = vsub.f32 0.0, %v475
          %v484 = vsub.f32 0.0, %v476
          %v485 = vmul.f32 %v477, 1.442695
          %v486 = vpow.pop %v485
          %v487 = vmul.f32 %v478, 1.442695
          %v488 = vpow.pop %v487
          %v489 = vmul.f32 %v479, 1.442695
          %v490 = vpow.pop %v489
          %v491 = vmul.f32 %v480, 1.442695
          %v492 = vpow.pop %v491
          %v493 = vmul.f32 %v481, 1.442695
          %v494 = vpow.pop %v493
          %v495 = vmul.f32 %v482, 1.442695
          %v496 = vpow.pop %v495
          %v497 = vmul.f32 %v483, 1.442695
          %v498 = vpow.pop %v497
          %v499 = vmul.f32 %v484, 1.442695
          %v500 = vpow.pop %v499
          %v501 = vadd.f32 %v486, 1.0
          %v502 = vadd.f32 %v488, 1.0
          %v503 = vadd.f32 %v490, 1.0
          %v504 = vadd.f32 %v492, 1.0
          %v505 = vadd.f32 %v494, 1.0
          %v506 = vadd.f32 %v496, 1.0
          %v507 = vadd.f32 %v498, 1.0
          %v508 = vadd.f32 %v500, 1.0
          %v509 = vlog2.pop %v501
          %v510 = vmul.f32 %v509, 0.6931472
          %v511 = vlog2.pop %v502
          %v512 = vmul.f32 %v511, 0.6931472
          %v513 = vlog2.pop %v503
          %v514 = vmul.f32 %v513, 0.6931472
          %v515 = vlog2.pop %v504
          %v516 = vmul.f32 %v515, 0.6931472
          %v517 = vlog2.pop %v505
          %v518 = vmul.f32 %v517, 0.6931472
          %v519 = vlog2.pop %v506
          %v520 = vmul.f32 %v519, 0.6931472
          %v521 = vlog2.pop %v507
          %v522 = vmul.f32 %v521, 0.6931472
          %v523 = vlog2.pop %v508
          %v524 = vmul.f32 %v523, 0.6931472
          %v525 = vadd.f32 %v461, %v510
          %v526 = vadd.f32 %v462, %v512
          %v527 = vadd.f32 %v463, %v514
          %v528 = vadd.f32 %v464, %v516
          %v529 = vadd.f32 %v465, %v518
          %v530 = vadd.f32 %v466, %v520
          %v531 = vadd.f32 %v467, %v522
          %v532 = vadd.f32 %v468, %v524
          %v533 = vsub.f32 %v365, %v453
          %v534 = vsub.f32 %v366, %v454
          %v535 = vsub.f32 %v367, %v455
          %v536 = vsub.f32 %v368, %v456
          %v537 = vsub.f32 %v369, %v457
          %v538 = vsub.f32 %v370, %v458
          %v539 = vsub.f32 %v371, %v459
          %v540 = vsub.f32 %v372, %v460
          %v541 = vsub.f32 0.0, %v525
          %v542 = vsub.f32 0.0, %v526
          %v543 = vsub.f32 0.0, %v527
          %v544 = vsub.f32 0.0, %v528
          %v545 = vsub.f32 0.0, %v529
          %v546 = vsub.f32 0.0, %v530
          %v547 = vsub.f32 0.0, %v531
          %v548 = vsub.f32 0.0, %v532
          %v549 = vmul.f32 %v533, 1.442695
          %v550 = vpow.pop %v549
          %v551 = vmul.f32 %v534, 1.442695
          %v552 = vpow.pop %v551
          %v553 = vmul.f32 %v535, 1.442695
          %v554 = vpow.pop %v553
          %v555 = vmul.f32 %v536, 1.442695
          %v556 = vpow.pop %v555
          %v557 = vmul.f32 %v537, 1.442695
          %v558 = vpow.pop %v557
          %v559 = vmul.f32 %v538, 1.442695
          %v560 = vpow.pop %v559
          %v561 = vmul.f32 %v539, 1.442695
          %v562 = vpow.pop %v561
          %v563 = vmul.f32 %v540, 1.442695
          %v564 = vpow.pop %v563
          %v565 = vsub.f32 %v381, %v525
          %v566 = vsub.f32 %v382, %v526
          %v567 = vsub.f32 %v383, %v527
          %v568 = vsub.f32 %v384, %v528
          %v569 = vsub.f32 %v385, %v529
          %v570 = vsub.f32 %v386, %v530
          %v571 = vsub.f32 %v387, %v531
          %v572 = vsub.f32 %v388, %v532
          %v573 = vmul.f32 %v565, 1.442695
          %v574 = vpow.pop %v573
          %v575 = vmul.f32 %v566, 1.442695
          %v576 = vpow.pop %v575
          %v577 = vmul.f32 %v567, 1.442695
          %v578 = vpow.pop %v577
          %v579 = vmul.f32 %v568, 1.442695
          %v580 = vpow.pop %v579
          %v581 = vmul.f32 %v569, 1.442695
          %v582 = vpow.pop %v581
          %v583 = vmul.f32 %v570, 1.442695
          %v584 = vpow.pop %v583
          %v585 = vmul.f32 %v571, 1.442695
          %v586 = vpow.pop %v585
          %v587 = vmul.f32 %v572, 1.442695
          %v588 = vpow.pop %v587
          %v589 = vsub.f32 %v550, %v574
          %v590 = vsub.f32 %v552, %v576
          %v591 = vsub.f32 %v554, %v578
          %v592 = vsub.f32 %v556, %v580
          %v593 = vsub.f32 %v558, %v582
          %v594 = vsub.f32 %v560, %v584
          %v595 = vsub.f32 %v562, %v586
          %v596 = vsub.f32 %v564, %v588
          %v597 = vmul.f32 %v342, %v325
          %v598 = vmul.f32 %v344, %v326
          %v599 = vmul.f32 %v346, %v327
          %v600 = vmul.f32 %v348, %v328
          %v601 = vmul.f32 %v350, %v329
          %v602 = vmul.f32 %v352, %v330
          %v603 = vmul.f32 %v354, %v331
          %v604 = vmul.f32 %v356, %v332
          %v605 = vsub.f32 %v597, %v307
          %v606 = vsub.f32 %v598, %v308
          %v607 = vsub.f32 %v599, %v309
          %v608 = vsub.f32 %v600, %v310
          %v609 = vsub.f32 %v601, %v311
          %v610 = vsub.f32 %v602, %v312
          %v611 = vsub.f32 %v603, %v313
          %v612 = vsub.f32 %v604, %v314
          %v613 = vmax.f32 %v597, 0.0
          %v614 = vmax.f32 %v598, 0.0
          %v615 = vmax.f32 %v599, 0.0
          %v616 = vmax.f32 %v600, 0.0
          %v617 = vmax.f32 %v601, 0.0
          %v618 = vmax.f32 %v602, 0.0
          %v619 = vmax.f32 %v603, 0.0
          %v620 = vmax.f32 %v604, 0.0
          %v621 = vand.u32 2147483647, %v597
          %v622 = vand.u32 2147483647, %v598
          %v623 = vand.u32 2147483647, %v599
          %v624 = vand.u32 2147483647, %v600
          %v625 = vand.u32 2147483647, %v601
          %v626 = vand.u32 2147483647, %v602
          %v627 = vand.u32 2147483647, %v603
          %v628 = vand.u32 2147483647, %v604
          %v629 = vsub.f32 0.0, %v621
          %v630 = vsub.f32 0.0, %v622
          %v631 = vsub.f32 0.0, %v623
          %v632 = vsub.f32 0.0, %v624
          %v633 = vsub.f32 0.0, %v625
          %v634 = vsub.f32 0.0, %v626
          %v635 = vsub.f32 0.0, %v627
          %v636 = vsub.f32 0.0, %v628
          %v637 = vmul.f32 %v629, 1.442695
          %v638 = vpow.pop %v637
          %v639 = vmul.f32 %v630, 1.442695
          %v640 = vpow.pop %v639
          %v641 = vmul.f32 %v631, 1.442695
          %v642 = vpow.pop %v641
          %v643 = vmul.f32 %v632, 1.442695
          %v644 = vpow.pop %v643
          %v645 = vmul.f32 %v633, 1.442695
          %v646 = vpow.pop %v645
          %v647 = vmul.f32 %v634, 1.442695
          %v648 = vpow.pop %v647
          %v649 = vmul.f32 %v635, 1.442695
          %v650 = vpow.pop %v649
          %v651 = vmul.f32 %v636, 1.442695
          %v652 = vpow.pop %v651
          %v653 = vadd.f32 %v638, 1.0
          %v654 = vadd.f32 %v640, 1.0
          %v655 = vadd.f32 %v642, 1.0
          %v656 = vadd.f32 %v644, 1.0
          %v657 = vadd.f32 %v646, 1.0
          %v658 = vadd.f32 %v648, 1.0
          %v659 = vadd.f32 %v650, 1.0
          %v660 = vadd.f32 %v652, 1.0
          %v661 = vlog2.pop %v653
          %v662 = vmul.f32 %v661, 0.6931472
          %v663 = vlog2.pop %v654
          %v664 = vmul.f32 %v663, 0.6931472
          %v665 = vlog2.pop %v655
          %v666 = vmul.f32 %v665, 0.6931472
          %v667 = vlog2.pop %v656
          %v668 = vmul.f32 %v667, 0.6931472
          %v669 = vlog2.pop %v657
          %v670 = vmul.f32 %v669, 0.6931472
          %v671 = vlog2.pop %v658
          %v672 = vmul.f32 %v671, 0.6931472
          %v673 = vlog2.pop %v659
          %v674 = vmul.f32 %v673, 0.6931472
          %v675 = vlog2.pop %v660
          %v676 = vmul.f32 %v675, 0.6931472
          %v677 = vadd.f32 %v613, %v662
          %v678 = vadd.f32 %v614, %v664
          %v679 = vadd.f32 %v615, %v666
          %v680 = vadd.f32 %v616, %v668
          %v681 = vadd.f32 %v617, %v670
          %v682 = vadd.f32 %v618, %v672
          %v683 = vadd.f32 %v619, %v674
          %v684 = vadd.f32 %v620, %v676
          %v685 = vmul.f32 %v677, 2.0
          %v686 = vmul.f32 %v678, 2.0
          %v687 = vmul.f32 %v679, 2.0
          %v688 = vmul.f32 %v680, 2.0
          %v689 = vmul.f32 %v681, 2.0
          %v690 = vmul.f32 %v682, 2.0
          %v691 = vmul.f32 %v683, 2.0
          %v692 = vmul.f32 %v684, 2.0
          %v693 = vsub.f32 %v605, %v685
          %v694 = vsub.f32 %v606, %v686
          %v695 = vsub.f32 %v607, %v687
          %v696 = vsub.f32 %v608, %v688
          %v697 = vsub.f32 %v609, %v689
          %v698 = vsub.f32 %v610, %v690
          %v699 = vsub.f32 %v611, %v691
          %v700 = vsub.f32 %v612, %v692
          %vm701 = vcmp.gt.f32.partialorder %v589, 1e-05
          %vm702 = vcmp.gt.f32.partialorder %v590, 1e-05
          %vm703 = vcmp.gt.f32.partialorder %v591, 1e-05
          %vm704 = vcmp.gt.f32.partialorder %v592, 1e-05
          %vm705 = vcmp.gt.f32.partialorder %v593, 1e-05
          %vm706 = vcmp.gt.f32.partialorder %v594, 1e-05
          %vm707 = vcmp.gt.f32.partialorder %v595, 1e-05
          %vm708 = vcmp.gt.f32.partialorder %v596, 1e-05
          %v709 = vmax.f32 %v589, 1e-12
          %v710 = vmax.f32 %v590, 1e-12
          %v711 = vmax.f32 %v591, 1e-12
          %v712 = vmax.f32 %v592, 1e-12
          %v713 = vmax.f32 %v593, 1e-12
          %v714 = vmax.f32 %v594, 1e-12
          %v715 = vmax.f32 %v595, 1e-12
          %v716 = vmax.f32 %v596, 1e-12
          %v717 = vlog2.pop %v709
          %v718 = vmul.f32 %v717, 0.6931472
          %v719 = vlog2.pop %v710
          %v720 = vmul.f32 %v719, 0.6931472
          %v721 = vlog2.pop %v711
          %v722 = vmul.f32 %v721, 0.6931472
          %v723 = vlog2.pop %v712
          %v724 = vmul.f32 %v723, 0.6931472
          %v725 = vlog2.pop %v713
          %v726 = vmul.f32 %v725, 0.6931472
          %v727 = vlog2.pop %v714
          %v728 = vmul.f32 %v727, 0.6931472
          %v729 = vlog2.pop %v715
          %v730 = vmul.f32 %v729, 0.6931472
          %v731 = vlog2.pop %v716
          %v732 = vmul.f32 %v731, 0.6931472
          %v733 = vsub.f32 %v693, 4.8481164
          %v734 = vsub.f32 %v694, 4.8481164
          %v735 = vsub.f32 %v695, 4.8481164
          %v736 = vsub.f32 %v696, 4.8481164
          %v737 = vsub.f32 %v697, 4.8481164
          %v738 = vsub.f32 %v698, 4.8481164
          %v739 = vsub.f32 %v699, 4.8481164
          %v740 = vsub.f32 %v700, 4.8481164
          %v741 = vsel %vm701, %v718, %v733
          %v742 = vsel %vm702, %v720, %v734
          %v743 = vsel %vm703, %v722, %v735
          %v744 = vsel %vm704, %v724, %v736
          %v745 = vsel %vm705, %v726, %v737
          %v746 = vsel %vm706, %v728, %v738
          %v747 = vsel %vm707, %v730, %v739
          %v748 = vsel %vm708, %v732, %v740
          %vm749 = vcmp.gt.f32.partialorder %v315, 0.999
          %v750 = vsel %vm749, 1, 0
          %v751 = vperm.slane %v750, 0
          %v752 = vperm.slane %v750, 1
          %v753 = vperm.slane %v750, 2
          %v754 = vperm.slane %v750, 3
          %vm755 = vcmp.eq.s32.totalorder %v751, 1
          %vm756 = vcmp.eq.s32.totalorder %v752, 1
          %vm757 = vcmp.eq.s32.totalorder %v753, 1
          %vm758 = vcmp.eq.s32.totalorder %v754, 1
          %v759 = vsel %vm755, %v541, %v741
          %v760 = vsel %vm756, %v542, %v742
          %v761 = vsel %vm757, %v543, %v743
          %v762 = vsel %vm758, %v544, %v744
          %v763 = vsel %vm755, %v545, %v745
          %v764 = vsel %vm756, %v546, %v746
          %v765 = vsel %vm757, %v547, %v747
          %v766 = vsel %vm758, %v548, %v748
          %vm767 = vcmp.lt.f32.partialorder %v315, -0.999
          %v768 = vsel %vm767, 1, 0
          %v769 = vperm.slane %v768, 0
          %v770 = vperm.slane %v768, 1
          %v771 = vperm.slane %v768, 2
          %v772 = vperm.slane %v768, 3
          %vm773 = vcmp.eq.s32.totalorder %v769, 1
          %vm774 = vcmp.eq.s32.totalorder %v770, 1
          %vm775 = vcmp.eq.s32.totalorder %v771, 1
          %vm776 = vcmp.eq.s32.totalorder %v772, 1
          %v777 = vsel %vm773, %v533, %v759
          %v778 = vsel %vm774, %v534, %v760
          %v779 = vsel %vm775, %v535, %v761
          %v780 = vsel %vm776, %v536, %v762
          %v781 = vsel %vm773, %v537, %v763
          %v782 = vsel %vm774, %v538, %v764
          %v783 = vsel %vm775, %v539, %v765
          %v784 = vsel %vm776, %v540, %v766
          %v785 = vadd.f32 %v777, %v281
          %v786 = vadd.f32 %v778, %v282
          %v787 = vadd.f32 %v779, %v283
          %v788 = vadd.f32 %v780, %v284
          %v789 = vadd.f32 %v781, %v285
          %v790 = vadd.f32 %v782, %v286
          %v791 = vadd.f32 %v783, %v287
          %v792 = vadd.f32 %v784, %v288
          %vm793 = vcmask 1041408
          %v794 = vsel %vm793, %v789, -inf
          %v795 = vmax.f32 %v785, %v794
          %v796 = vrot.slane %v795, 4
          %v797 = vmax.f32 %v795, %v796
          %v798 = vrot.slane %v797, 2
          %v799 = vmax.f32 %v797, %v798
          %v800 = vrot.slane %v799, 1
          %v801 = vmax.f32 %v799, %v800
          %v802 = vsel %vm793, %v790, -inf
          %v803 = vmax.f32 %v786, %v802
          %v804 = vrot.slane %v803, 4
          %v805 = vmax.f32 %v803, %v804
          %v806 = vrot.slane %v805, 2
          %v807 = vmax.f32 %v805, %v806
          %v808 = vrot.slane %v807, 1
          %v809 = vmax.f32 %v807, %v808
          %v810 = vsel %vm793, %v791, -inf
          %v811 = vmax.f32 %v787, %v810
          %v812 = vrot.slane %v811, 4
          %v813 = vmax.f32 %v811, %v812
          %v814 = vrot.slane %v813, 2
          %v815 = vmax.f32 %v813, %v814
          %v816 = vrot.slane %v815, 1
          %v817 = vmax.f32 %v815, %v816
          %v818 = vsel %vm793, %v792, -inf
          %v819 = vmax.f32 %v788, %v818
          %v820 = vrot.slane %v819, 4
          %v821 = vmax.f32 %v819, %v820
          %v822 = vrot.slane %v821, 2
          %v823 = vmax.f32 %v821, %v822
          %v824 = vrot.slane %v823, 1
          %v825 = vmax.f32 %v823, %v824
          %v826 = vsub.f32 %v785, %v801
          %v827 = vsub.f32 %v786, %v809
          %v828 = vsub.f32 %v787, %v817
          %v829 = vsub.f32 %v788, %v825
          %v830 = vsub.f32 %v789, %v801
          %v831 = vsub.f32 %v790, %v809
          %v832 = vsub.f32 %v791, %v817
          %v833 = vsub.f32 %v792, %v825
          %v834 = vmul.f32 %v826, 1.442695
          %v835 = vpow.pop %v834
          %v836 = vmul.f32 %v827, 1.442695
          %v837 = vpow.pop %v836
          %v838 = vmul.f32 %v828, 1.442695
          %v839 = vpow.pop %v838
          %v840 = vmul.f32 %v829, 1.442695
          %v841 = vpow.pop %v840
          %v842 = vmul.f32 %v830, 1.442695
          %v843 = vpow.pop %v842
          %v844 = vmul.f32 %v831, 1.442695
          %v845 = vpow.pop %v844
          %v846 = vmul.f32 %v832, 1.442695
          %v847 = vpow.pop %v846
          %v848 = vmul.f32 %v833, 1.442695
          %v849 = vpow.pop %v848
          %v850 = vsel %vm793, %v843, 0.0
          %v851 = vadd.f32 %v835, %v850
          %v852 = vrot.slane %v851, 4
          %v853 = vadd.f32 %v851, %v852
          %v854 = vrot.slane %v853, 2
          %v855 = vadd.f32 %v853, %v854
          %v856 = vrot.slane %v855, 1
          %v857 = vadd.f32 %v855, %v856
          %v858 = vsel %vm793, %v845, 0.0
          %v859 = vadd.f32 %v837, %v858
          %v860 = vrot.slane %v859, 4
          %v861 = vadd.f32 %v859, %v860
          %v862 = vrot.slane %v861, 2
          %v863 = vadd.f32 %v861, %v862
          %v864 = vrot.slane %v863, 1
          %v865 = vadd.f32 %v863, %v864
          %v866 = vsel %vm793, %v847, 0.0
          %v867 = vadd.f32 %v839, %v866
          %v868 = vrot.slane %v867, 4
          %v869 = vadd.f32 %v867, %v868
          %v870 = vrot.slane %v869, 2
          %v871 = vadd.f32 %v869, %v870
          %v872 = vrot.slane %v871, 1
          %v873 = vadd.f32 %v871, %v872
          %v874 = vsel %vm793, %v849, 0.0
          %v875 = vadd.f32 %v841, %v874
          %v876 = vrot.slane %v875, 4
          %v877 = vadd.f32 %v875, %v876
          %v878 = vrot.slane %v877, 2
          %v879 = vadd.f32 %v877, %v878
          %v880 = vrot.slane %v879, 1
          %v881 = vadd.f32 %v879, %v880
          %v882 = vlog2.pop %v857
          %v883 = vmul.f32 %v882, 0.6931472
          %v884 = vlog2.pop %v865
          %v885 = vmul.f32 %v884, 0.6931472
          %v886 = vlog2.pop %v873
          %v887 = vmul.f32 %v886, 0.6931472
          %v888 = vlog2.pop %v881
          %v889 = vmul.f32 %v888, 0.6931472
          %v890 = vadd.f32 %v801, %v883
          %v891 = vadd.f32 %v809, %v885
          %v892 = vadd.f32 %v817, %v887
          %v893 = vadd.f32 %v825, %v889
          %v894 = vsel %vm793, %v285, -inf
          %v895 = vmax.f32 %v281, %v894
          %v896 = vrot.slane %v895, 4
          %v897 = vmax.f32 %v895, %v896
          %v898 = vrot.slane %v897, 2
          %v899 = vmax.f32 %v897, %v898
          %v900 = vrot.slane %v899, 1
          %v901 = vmax.f32 %v899, %v900
          %v902 = vsel %vm793, %v286, -inf
          %v903 = vmax.f32 %v282, %v902
          %v904 = vrot.slane %v903, 4
          %v905 = vmax.f32 %v903, %v904
          %v906 = vrot.slane %v905, 2
          %v907 = vmax.f32 %v905, %v906
          %v908 = vrot.slane %v907, 1
          %v909 = vmax.f32 %v907, %v908
          %v910 = vsel %vm793, %v287, -inf
          %v911 = vmax.f32 %v283, %v910
          %v912 = vrot.slane %v911, 4
          %v913 = vmax.f32 %v911, %v912
          %v914 = vrot.slane %v913, 2
          %v915 = vmax.f32 %v913, %v914
          %v916 = vrot.slane %v915, 1
          %v917 = vmax.f32 %v915, %v916
          %v918 = vsel %vm793, %v288, -inf
          %v919 = vmax.f32 %v284, %v918
          %v920 = vrot.slane %v919, 4
          %v921 = vmax.f32 %v919, %v920
          %v922 = vrot.slane %v921, 2
          %v923 = vmax.f32 %v921, %v922
          %v924 = vrot.slane %v923, 1
          %v925 = vmax.f32 %v923, %v924
          %v926 = vsub.f32 %v281, %v901
          %v927 = vsub.f32 %v282, %v909
          %v928 = vsub.f32 %v283, %v917
          %v929 = vsub.f32 %v284, %v925
          %v930 = vsub.f32 %v285, %v901
          %v931 = vsub.f32 %v286, %v909
          %v932 = vsub.f32 %v287, %v917
          %v933 = vsub.f32 %v288, %v925
          %v934 = vmul.f32 %v926, 1.442695
          %v935 = vpow.pop %v934
          %v936 = vmul.f32 %v927, 1.442695
          %v937 = vpow.pop %v936
          %v938 = vmul.f32 %v928, 1.442695
          %v939 = vpow.pop %v938
          %v940 = vmul.f32 %v929, 1.442695
          %v941 = vpow.pop %v940
          %v942 = vmul.f32 %v930, 1.442695
          %v943 = vpow.pop %v942
          %v944 = vmul.f32 %v931, 1.442695
          %v945 = vpow.pop %v944
          %v946 = vmul.f32 %v932, 1.442695
          %v947 = vpow.pop %v946
          %v948 = vmul.f32 %v933, 1.442695
          %v949 = vpow.pop %v948
          %v950 = vsel %vm793, %v943, 0.0
          %v951 = vadd.f32 %v935, %v950
          %v952 = vrot.slane %v951, 4
          %v953 = vadd.f32 %v951, %v952
          %v954 = vrot.slane %v953, 2
          %v955 = vadd.f32 %v953, %v954
          %v956 = vrot.slane %v955, 1
          %v957 = vadd.f32 %v955, %v956
          %v958 = vsel %vm793, %v945, 0.0
          %v959 = vadd.f32 %v937, %v958
          %v960 = vrot.slane %v959, 4
          %v961 = vadd.f32 %v959, %v960
          %v962 = vrot.slane %v961, 2
          %v963 = vadd.f32 %v961, %v962
          %v964 = vrot.slane %v963, 1
          %v965 = vadd.f32 %v963, %v964
          %v966 = vsel %vm793, %v947, 0.0
          %v967 = vadd.f32 %v939, %v966
          %v968 = vrot.slane %v967, 4
          %v969 = vadd.f32 %v967, %v968
          %v970 = vrot.slane %v969, 2
          %v971 = vadd.f32 %v969, %v970
          %v972 = vrot.slane %v971, 1
          %v973 = vadd.f32 %v971, %v972
          %v974 = vsel %vm793, %v949, 0.0
          %v975 = vadd.f32 %v941, %v974
          %v976 = vrot.slane %v975, 4
          %v977 = vadd.f32 %v975, %v976
          %v978 = vrot.slane %v977, 2
          %v979 = vadd.f32 %v977, %v978
          %v980 = vrot.slane %v979, 1
          %v981 = vadd.f32 %v979, %v980
          %v982 = vlog2.pop %v957
          %v983 = vmul.f32 %v982, 0.6931472
          %v984 = vlog2.pop %v965
          %v985 = vmul.f32 %v984, 0.6931472
          %v986 = vlog2.pop %v973
          %v987 = vmul.f32 %v986, 0.6931472
          %v988 = vlog2.pop %v981
          %v989 = vmul.f32 %v988, 0.6931472
          %v990 = vadd.f32 %v901, %v983
          %v991 = vadd.f32 %v909, %v985
          %v992 = vadd.f32 %v917, %v987
          %v993 = vadd.f32 %v925, %v989
          %v994 = vsub.f32 %v890, %v990
          %v995 = vsub.f32 %v891, %v991
          %v996 = vsub.f32 %v892, %v992
          %v997 = vsub.f32 %v893, %v993
          %v998 = vsub.f32 0.0, %v994
          %v999 = vsub.f32 0.0, %v995
          %v1000 = vsub.f32 0.0, %v996
          %v1001 = vsub.f32 0.0, %v997
          %v1002 = vlaneseq
          %v1003 = vand.u32 %v1002, 127
          %v1004 = vadd.s32 %v1003, 128
          %v1005 = vadd.s32 %v1003, 256
          %v1006 = vadd.s32 %v1003, 384
          %v1007 = vstv %s276
          %v1008 = vadd.s32 %v1003, %v1007
          %v1009 = vadd.s32 %v1004, %v1007
          %v1010 = vadd.s32 %v1005, %v1007
          %v1011 = vadd.s32 %v1006, %v1007
          %v1012 = vstv %s275
          %vm1013 = vcmp.lt.s32.totalorder %v1008, %v1012
          %vm1014 = vcmp.lt.s32.totalorder %v1009, %v1012
          %vm1015 = vcmp.lt.s32.totalorder %v1010, %v1012
          %vm1016 = vcmp.lt.s32.totalorder %v1011, %v1012
          %v1017 = vsel %vm1013, 1, 0
          %v1018 = vsel %vm1014, 1, 0
          %v1019 = vsel %vm1015, 1, 0
          %v1020 = vsel %vm1016, 1, 0
          %v1021 = vcvt.s32.f32 %v1017
          %v1022 = vcvt.s32.f32 %v1018
          %v1023 = vcvt.s32.f32 %v1019
          %v1024 = vcvt.s32.f32 %v1020
          %v1025 = vmul.f32 %v998, %v1021
          %v1026 = vmul.f32 %v999, %v1022
          %v1027 = vmul.f32 %v1000, %v1023
          %v1028 = vmul.f32 %v1001, %v1024
          %vm1029 = vcmask 1040384
          %v1030 = vsel %vm1029, %v1025, 0.0
          %v1031 = vsel %vm1029, %v1026, 0.0
          %v1032 = vadd.f32 %v1030, %v1031
          %v1033 = vsel %vm1029, %v1027, 0.0
          %v1034 = vadd.f32 %v1032, %v1033
          %v1035 = vsel %vm1029, %v1028, 0.0
          %v1036 = vadd.f32 %v1034, %v1035
          %1037 = vadd.xlane.f32.xlu0 %v1036
          %v1038 = vpop.xlane.xlu0 %1037
          %v1039 = vrot.slane %v1038, 4
          %v1040 = vadd.f32 %v1038, %v1039
          %v1041 = vrot.slane %v1040, 2
          %v1042 = vadd.f32 %v1040, %v1041
          %v1043 = vrot.slane %v1042, 1
          %v1044 = vadd.f32 %v1042, %v1043
          %s1045 = vtos %v1044
          %vm1046 = vcmp.eq.s32.totalorder %v1003, 0
          %v1047 = vstv %s1045
          %v1048 = vsel %vm1046, %v1047, 0.0
          %1049 = vst [vmem:[%s274] sm:$0x1] %v1048
        $region55: #{discretized_mix_logistic_loss.1} parent=46 // pred_fallthru
          _
        %p1050 = scmp.ge.s32.totalorder %s276, %s275
        // Predicated region
        $region56: #{discretized_mix_logistic_loss.1} parent=46 // pred_check
          %p1051 = pneg %p1050
        $region57: #{discretized_mix_logistic_loss.1} parent=46 // pred_check_branch
          %1053 = sbr.rel (%p1051) target = $region59
        $region58: #{discretized_mix_logistic_loss.1} parent=46 // pred_region
          %1054 = vst [vmem:[%s274] sm:$0x1] 0.0
        $region59: #{discretized_mix_logistic_loss.1} parent=46 // pred_fallthru
          _
        %p1055 = scmp.lt.s32.totalorder %s26, 1
        %s1056 = scalar_select %p1055, %s26, 1
        %p1057 = scmp.lt.s32.totalorder %s27, 3
        %s1058 = scalar_select %p1057, %s27, 3
        %s1059 = smul.addr %s1056, 4
        %s1060 = sadd.s32 %s1058, %s1059
        %s1061 = scalar_lea.vmem %s3, %s1060
        // Predicated region
        $region60: #{discretized_mix_logistic_loss.1} parent=46 // pred_check
          %p1062 = pneg %p110
        $region61: #{discretized_mix_logistic_loss.1} parent=46 // pred_check_branch
          %1064 = sbr.rel (%p1062) target = $region63
        $region62: #{discretized_mix_logistic_loss.1} parent=46 // pred_region
          _
        $region63: #{discretized_mix_logistic_loss.1} parent=46 // pred_fallthru
          _
      $region47: #{discretized_mix_logistic_loss.1} parent=5 // pred_fallthru
        _
      %p1065 = scmp.le.s32.totalorder 2, %s17
      // Predicated region
      $region64: #{discretized_mix_logistic_loss.1} parent=5 // pred_check
        %p1066 = pneg %p1065
      $region65: #{discretized_mix_logistic_loss.1} parent=5 // pred_check_branch
        %1068 = sbr.rel (%p1066) target = $region67
      $region66: #{discretized_mix_logistic_loss.1} parent=5 // pred_region
        %s1069 = ssub.s32 %s17, 2
        // Predicated region
        $region68: #{discretized_mix_logistic_loss.1} parent=66 // pred_check
          %p1070 = pneg %p116
        $region69: #{discretized_mix_logistic_loss.1} parent=66 // pred_check_branch
          %1072 = sbr.rel (%p1070) target = $region71
        $region70: #{discretized_mix_logistic_loss.1} parent=66 // pred_region
          %p1073 = scmp.lt.s32.totalorder %s28, 1
          %s1074 = scalar_select %p1073, %s28, 1
          %p1075 = scmp.lt.s32.totalorder %s29, 3
          %s1076 = scalar_select %p1075, %s29, 3
          %s1077 = smul.addr %s1074, 4
          %s1078 = sadd.s32 %s1076, %s1077
          %s1079 = scalar_lea.vmem %s3, %s1078
        $region71: #{discretized_mix_logistic_loss.1} parent=66 // pred_fallthru
          _
      $region67: #{discretized_mix_logistic_loss.1} parent=5 // pred_fallthru
        _
    $region6: #{discretized_mix_logistic_loss.1} parent=1 // loop_footer
      %s21 = sadd.s32 1, %s17
    $region7: #{discretized_mix_logistic_loss.1} parent=1 // loop_footer_branch
      %16 = sbr.rel target = $region3
    $region8: #{discretized_mix_logistic_loss.1} parent=1 // loop_exit
      _

</llo_original>
